<compile_context>
chip_gen: v6e
topology: v6e:2x2x1
jax: 0.10.0
libtpu: 0.0.40
codegen_flags: <defaults>
</compile_context>

<pallas_src>
import numpy as np
import jax
import jax.numpy as jnp
from jax.experimental import pallas as pl
from jax.experimental.pallas import tpu as pltpu


# ----------------------------- parameter setup (host constants) -----------------------------

def _hz_to_mel_slaney(f):
    f = np.asarray(f, dtype=np.float64)
    f_sp = 200.0 / 3.0
    min_log_hz = 1000.0
    min_log_mel = min_log_hz / f_sp
    logstep = np.log(6.4) / 27.0
    return np.where(f >= min_log_hz,
                    min_log_mel + np.log(np.maximum(f, 1e-10) / min_log_hz) / logstep,
                    f / f_sp)


def _mel_to_hz_slaney(m):
    m = np.asarray(m, dtype=np.float64)
    f_sp = 200.0 / 3.0
    min_log_hz = 1000.0
    min_log_mel = min_log_hz / f_sp
    logstep = np.log(6.4) / 27.0
    return np.where(m >= min_log_mel,
                    min_log_hz * np.exp(logstep * (m - min_log_mel)),
                    m * f_sp)


def slaney_mel_filterbank(n_freqs, n_mels, sample_rate, fmin, fmax):
    """Matches torchaudio.functional.melscale_fbanks(mel_scale='slaney', norm='slaney').
    Returns (n_freqs, n_mels) float32."""
    all_freqs = np.linspace(0.0, sample_rate / 2.0, n_freqs)
    m_min = _hz_to_mel_slaney(fmin)
    m_max = _hz_to_mel_slaney(fmax)
    m_pts = np.linspace(m_min, m_max, n_mels + 2)
    f_pts = _mel_to_hz_slaney(m_pts)                       # (n_mels + 2,)
    f_diff = f_pts[1:] - f_pts[:-1]                        # (n_mels + 1,)
    slopes = f_pts[None, :] - all_freqs[:, None]           # (n_freqs, n_mels + 2)
    down = -slopes[:, :-2] / f_diff[:-1]
    up = slopes[:, 2:] / f_diff[1:]
    fb = np.maximum(0.0, np.minimum(down, up))             # (n_freqs, n_mels)
    enorm = 2.0 / (f_pts[2:n_mels + 2] - f_pts[:n_mels])   # slaney norm
    fb = fb * enorm[None, :]
    return fb.astype(np.float32)


def hann_window_periodic(n):
    """torch.hann_window default (periodic=True)."""
    k = np.arange(n, dtype=np.float64)
    return (0.5 * (1.0 - np.cos(2.0 * np.pi * k / n))).astype(np.float32)


def windowed_dft_matrix(n_fft, n_keep, n_keep_pad):
    """[window*cos | window*sin] for bins 0..n_keep-1, each half zero-padded on the freq axis
    to n_keep_pad columns.  Shape (n_fft, 2*n_keep_pad), float32 (caller casts to bf16).
    Zero columns contribute exactly zero downstream."""
    n = np.arange(n_fft, dtype=np.float64)[:, None]
    k = np.arange(n_keep, dtype=np.float64)[None, :]
    ang = 2.0 * np.pi * n * k / n_fft
    win = hann_window_periodic(n_fft).astype(np.float64)[:, None]
    W = np.zeros((n_fft, 2 * n_keep_pad), dtype=np.float32)
    W[:, :n_keep] = (win * np.cos(ang)).astype(np.float32)
    W[:, n_keep_pad:n_keep_pad + n_keep] = (win * np.sin(ang)).astype(np.float32)
    return W


# ----------------------------- Pallas wrapper + kernel -----------------------------

def log_mel_spectrogram(wav, *, n_fft, num_mels, sampling_rate, hop_size,
                        win_size, fmin, fmax):
    """wav: (B, T) float32 -> logmel (B, num_mels, F) float32 (torchaudio layout)."""
    assert win_size == n_fft, "this kernel assumes win_size == n_fft"
    assert n_fft % hop_size == 0, "in-kernel framing assumes hop_size divides n_fft"
    B, T = wav.shape
    pad = (n_fft - hop_size) // 2
    assert pad < T, "reflect padding requires pad < T"

    # Reflect pad (same as F.pad(wav, (pad, pad), 'reflect')).
    wav_p = jnp.pad(wav, ((0, 0), (pad, pad)), mode="reflect")
    T_pad = T + 2 * pad
    assert T_pad >= n_fft, "input too short for one STFT frame"

    n_frames = 1 + (T_pad - n_fft) // hop_size             # center=False framing
    ratio = n_fft // hop_size                              # frames overlap by (ratio-1) hops

    # ---------------- frame-axis tiling (generation-aware) ----------------
    try:                                                   # v5e/v6e (128 MiB VMEM) -> bigger tiles
        vmem_cap = pltpu.get_tpu_info().vmem_capacity_bytes
    except Exception:                                      # conservative (v7x-safe) default
        vmem_cap = 64 * 1024 * 1024
    max_tile_f = 512 if vmem_cap >= 96 * 1024 * 1024 else 256

    if n_frames <= max_tile_f:
        tile_f = n_frames
        # v7x has 2 TensorCores: with B == 1, split the frame axis (lane-dense halves) so
        # both cores get a parallel grid block.
        if B == 1 and n_frames >= 256:
            half = (n_frames + 1) // 2
            tile_f = ((half + 127) // 128) * 128
    else:
        tile_f = max_tile_f                                # multiple of 128 -> lane-dense stores
    n_f_tiles = pl.cdiv(n_frames, tile_f)
    F_padded = n_f_tiles * tile_f

    # ---------------- host-side hop-chunking + per-tile halo ----------------
    # Row r of `chunks` holds samples [r*hop, (r+1)*hop); frame f = rows f .. f+ratio-1.
    rows_per_tile = tile_f + ratio - 1
    n_rows_have = n_frames + ratio - 1                     # (n_frames-1)*hop + n_fft <= T_pad
    chunks = wav_p[:, :n_rows_have * hop_size].reshape(B, n_rows_have, hop_size)
    n_rows_needed = F_padded + ratio - 1
    if n_rows_needed > n_rows_have:                        # zero rows for padded (discarded) frames
        chunks = jnp.pad(chunks, ((0, 0), (0, n_rows_needed - n_rows_have), (0, 0)))
    # Overlapping row-tiles with a (ratio-1)-row halo: ~1% HBM duplication, but per-step VMEM
    # becomes independent of the audio length and the waveform DMA pipelines deeply.
    row_idx = (np.arange(n_f_tiles)[:, None] * tile_f
               + np.arange(rows_per_tile)[None, :])        # (n_f_tiles, rows_per_tile)
    chunks_t = chunks[:, row_idx, :]                       # (B, n_f_tiles, rows_per_tile, hop)

    # ---------------- constants (bf16 MXU operands) ----------------
    n_freq = n_fft // 2 + 1
    fb = slaney_mel_filterbank(n_freq, num_mels, sampling_rate, fmin, fmax)   # (n_freq, n_mels)
    # Slaney mel weight at the Nyquist bin is exactly 0 whenever fmax <= sr/2 -> drop that bin
    # so each cos/sin half pads to round_up(n_fft/2, 128) instead of round_up(n_fft/2+1, 128).
    fb_max = max(float(np.max(np.abs(fb))), 1e-30)
    n_keep = n_freq - 1 if float(np.max(np.abs(fb[-1]))) <= 1e-7 * fb_max else n_freq
    n_keep_pad = ((n_keep + 127) // 128) * 128

    W = jnp.asarray(windowed_dft_matrix(n_fft, n_keep, n_keep_pad), dtype=jnp.bfloat16)
    melT_np = np.zeros((num_mels, n_keep_pad), dtype=np.float32)
    melT_np[:, :n_keep] = fb[:n_keep].T
    melT = jnp.asarray(melT_np, dtype=jnp.bfloat16)        # (num_mels, n_keep_pad)

    use_split_k = (hop_size >= 128) and (ratio > 1)

    def kernel(chunks_ref, dft_ref, melT_ref, out_ref):
        # chunks_ref: (1, 1, rows_per_tile, hop) f32   dft_ref: (n_fft, 2*n_keep_pad) bf16
        # melT_ref:   (num_mels, n_keep_pad)    bf16   out_ref: (1, num_mels, tile_f) f32
        if use_split_k:
            # Split-K: accumulate `ratio` partial matmuls over hop-sized K blocks (no lane-offset
            # concatenate). Mathematically identical to frames @ W; f32 accumulation throughout.
            y = None
            for c in range(ratio):
                lhs = chunks_ref[0, 0, c:c + tile_f, :].astype(jnp.bfloat16)
                part = jnp.dot(lhs, dft_ref[c * hop_size:(c + 1) * hop_size, :],
                               preferred_element_type=jnp.float32)
                y = part if y is None else y + part
        else:
            rows = chunks_ref[0, 0].astype(jnp.bfloat16)             # (rows_per_tile, hop)
            if ratio == 1:
                frames = rows                                        # (tile_f, n_fft)
            else:
                frames = jnp.concatenate(
                    [rows[c:c + tile_f, :] for c in range(ratio)], axis=1)   # (tile_f, n_fft)
            # One fused windowed-DFT matmul (re | im), each half lane-padded to 128.
            y = jnp.dot(frames, dft_ref[...], preferred_element_type=jnp.float32)
        re = y[:, :n_keep_pad]
        im = y[:, n_keep_pad:]
        mag = jnp.sqrt(re * re + im * im)                            # power=1.0 (magnitude), f32
        # melT (m, K) x mag (tile_f, K) contracted on K -> lane-dense (m, tile_f) output block
        # (same A @ B^T form the flash-attention reference kernels use; no big XLU transpose).
        mel = jax.lax.dot_general(
            melT_ref[...], mag.astype(jnp.bfloat16),
            dimension_numbers=(((1,), (1,)), ((), ())),
            preferred_element_type=jnp.float32)
        out_ref[0] = jnp.log(jnp.maximum(mel, 1e-5))

    # Advisory cost estimate so XLA schedules the host-side pad/reshape/slice around the kernel.
    flops = (4 * B * F_padded * n_fft * n_keep_pad           # fused [cos|sin] DFT matmul
             + 2 * B * F_padded * n_keep_pad * num_mels)     # mel matmul
    bytes_accessed = (int(chunks_t.size) * 4 + int(W.size) * 2 + int(melT.size) * 2
                      + B * num_mels * F_padded * 4)
    cost = pl.CostEstimate(flops=int(flops),
                           transcendentals=int(B * F_padded * (n_keep_pad + num_mels)),
                           bytes_accessed=int(bytes_accessed))

    out = pl.pallas_call(
        kernel,
        out_shape=jax.ShapeDtypeStruct((B, num_mels, F_padded), jnp.float32),
        grid_spec=pltpu.PrefetchScalarGridSpec(
            num_scalar_prefetch=0,
            grid=(B, n_f_tiles),
            in_specs=[
                # Per-tile halo block of hop-chunked waveform rows (VMEM use independent of T).
                pl.BlockSpec((1, 1, rows_per_tile, hop_size), lambda b, j: (b, j, 0, 0)),
                # Grid-invariant bf16 constants (half the f32 footprint).
                pl.BlockSpec((n_fft, 2 * n_keep_pad), lambda b, j: (0, 0)),
                pl.BlockSpec((num_mels, n_keep_pad), lambda b, j: (0, 0)),
            ],
            out_specs=pl.BlockSpec((1, num_mels, tile_f), lambda b, j: (b, 0, j)),
        ),
        compiler_params=pltpu.CompilerParams(
            dimension_semantics=("parallel", "parallel"),
            vmem_limit_bytes=48 * 1024 * 1024),   # leaves headroom on v7x's 64 MiB physical VMEM
        cost_estimate=cost,
    )(chunks_t, W, melT)

    if F_padded != n_frames:
        out = out[:, :, :n_frames]
    return out                                              # (B, num_mels, F)


# ----------------------------- pure-JAX reference (for validation) -----------------------------

def _reference_logmel(wav, *, n_fft, num_mels, sampling_rate, hop_size, win_size, fmin, fmax):
    pad = (n_fft - hop_size) // 2
    wav_p = jnp.pad(wav, ((0, 0), (pad, pad)), mode="reflect")
    T_pad = wav_p.shape[1]
    n_frames = 1 + (T_pad - n_fft) // hop_size
    idx = np.arange(n_frames)[:, None] * hop_size + np.arange(n_fft)[None, :]
    frames = wav_p[:, idx]                                           # (B, F, n_fft)
    win = jnp.asarray(hann_window_periodic(n_fft))
    spec = jnp.abs(jnp.fft.rfft(frames * win, axis=-1))              # (B, F, n_freq)
    fb = jnp.asarray(slaney_mel_filterbank(n_fft // 2 + 1, num_mels,
                                           sampling_rate, fmin, fmax))
    mel = jnp.einsum('bfk,km->bmf', spec, fb)                        # (B, n_mels, F)
    return jnp.log(jnp.maximum(mel, 1e-5))


# ----------------------------- main -----------------------------

if __name__ == "__main__":
    # Small, deterministic configuration consistent with the module's __init__.
    n_fft = 128
    num_mels = 16
    sampling_rate = 8000
    hop_size = 32
    win_size = 128
    fmin = 0.0
    fmax = 4000.0

    B, T = 2, 256
    key = jax.random.PRNGKey(0)
    wav = jax.random.normal(key, (B, T), dtype=jnp.float32)

    logmel = log_mel_spectrogram(
        wav, n_fft=n_fft, num_mels=num_mels, sampling_rate=sampling_rate,
        hop_size=hop_size, win_size=win_size, fmin=fmin, fmax=fmax)
    logmel = jax.block_until_ready(logmel)

    # Sanity: expected shape (B, num_mels, n_frames) with n_frames = 8 here.
    assert logmel.shape == (B, num_mels, 8), logmel.shape
    assert bool(jnp.all(jnp.isfinite(logmel)))

    # Numerical check against a pure-JAX rfft reference (bf16 MXU operands with f32 accumulate
    # give ~1e-2 typical log-domain error; keep a safety margin).
    ref = _reference_logmel(
        wav, n_fft=n_fft, num_mels=num_mels, sampling_rate=sampling_rate,
        hop_size=hop_size, win_size=win_size, fmin=fmin, fmax=fmax)
    max_diff = float(jnp.max(jnp.abs(logmel - ref)))
    assert max_diff < 1e-1, f"max |diff| vs reference too large: {max_diff}"

    print("KERNEL_OK")
</pallas_src>

<mosaic_0001>
module attributes {stable_mosaic.version = 11 : i64} {
  func.func @kernel(%arg0: i32, %arg1: i32, %arg2: memref<1x1x11x32xf32, #tpu.memory_space<vmem>>, %arg3: memref<128x256xbf16, #tpu.memory_space<vmem>>, %arg4: memref<16x128xbf16, #tpu.memory_space<vmem>>, %arg5: memref<1x16x8xf32, #tpu.memory_space<vmem>>) attributes {dimension_semantics = [#tpu.dimension_semantics<parallel>, #tpu.dimension_semantics<parallel>], iteration_bounds = array<i64: 2, 1>, scalar_prefetch = 0 : i64, scratch_operands = 0 : i64, tpu.core_type = #tpu.core_type<tc>, window_params = [{transform_indices = @transform_0, window_bounds = array<i64: 1, 1, 11, 32>}, {pipeline_mode = #tpu.pipeline_mode<synchronous>, transform_indices = @transform_1, window_bounds = array<i64: 128, 256>}, {pipeline_mode = #tpu.pipeline_mode<synchronous>, transform_indices = @transform_2, window_bounds = array<i64: 16, 128>}, {transform_indices = @transform_3, window_bounds = array<i64: 1, 16, 8>}]} {
    %c0 = arith.constant 0 : index
    %c0_0 = arith.constant 0 : index
    %c0_1 = arith.constant 0 : index
    %c0_2 = arith.constant 0 : index
    %0 = vector.load %arg2[%c0, %c0_0, %c0_1, %c0_2] : memref<1x1x11x32xf32, #tpu.memory_space<vmem>>, vector<1x1x11x32xf32>
    %1 = vector.shape_cast %0 : vector<1x1x11x32xf32> to vector<11x32xf32>
    %2 = arith.truncf %1 : vector<11x32xf32> to vector<11x32xbf16>
    %3 = vector.extract_strided_slice %2 {offsets = [0, 0], sizes = [8, 32], strides = [1, 1]} : vector<11x32xbf16> to vector<8x32xbf16>
    %4 = vector.extract_strided_slice %2 {offsets = [1, 0], sizes = [8, 32], strides = [1, 1]} : vector<11x32xbf16> to vector<8x32xbf16>
    %5 = vector.extract_strided_slice %2 {offsets = [2, 0], sizes = [8, 32], strides = [1, 1]} : vector<11x32xbf16> to vector<8x32xbf16>
    %6 = vector.extract_strided_slice %2 {offsets = [3, 0], sizes = [8, 32], strides = [1, 1]} : vector<11x32xbf16> to vector<8x32xbf16>
    %7 = tpu.concatenate %3, %4, %5, %6 in 1 : vector<8x32xbf16>, vector<8x32xbf16>, vector<8x32xbf16>, vector<8x32xbf16> -> vector<8x128xbf16>
    %c0_3 = arith.constant 0 : index
    %c0_4 = arith.constant 0 : index
    %8 = vector.load %arg3[%c0_3, %c0_4] : memref<128x256xbf16, #tpu.memory_space<vmem>>, vector<128x256xbf16>
    %cst = arith.constant dense<0.000000e+00> : vector<8x256xf32>
    %9 = tpu.matmul %7, %8, %cst {dimension_numbers = #tpu.dot_dimension_numbers<[1], [0], [0], [1], [0, 0, 1, 1], [], []>} : vector<8x128xbf16>, vector<128x256xbf16>, vector<8x256xf32> -> vector<8x256xf32>
    %10 = vector.extract_strided_slice %9 {offsets = [0, 0], sizes = [8, 128], strides = [1, 1]} : vector<8x256xf32> to vector<8x128xf32>
    %11 = vector.extract_strided_slice %9 {offsets = [0, 128], sizes = [8, 128], strides = [1, 1]} : vector<8x256xf32> to vector<8x128xf32>
    %12 = arith.mulf %10, %10 : vector<8x128xf32>
    %13 = arith.mulf %11, %11 : vector<8x128xf32>
    %14 = arith.addf %12, %13 : vector<8x128xf32>
    %15 = math.sqrt %14 : vector<8x128xf32>
    %c0_5 = arith.constant 0 : index
    %c0_6 = arith.constant 0 : index
    %16 = vector.load %arg4[%c0_5, %c0_6] : memref<16x128xbf16, #tpu.memory_space<vmem>>, vector<16x128xbf16>
    %17 = arith.truncf %15 : vector<8x128xf32> to vector<8x128xbf16>
    %cst_7 = arith.constant dense<0.000000e+00> : vector<16x8xf32>
    %18 = tpu.matmul %16, %17, %cst_7 {dimension_numbers = #tpu.dot_dimension_numbers<[1], [1], [0], [0], [0, 0, 1, 0], [], []>} : vector<16x128xbf16>, vector<8x128xbf16>, vector<16x8xf32> -> vector<16x8xf32>
    %cst_8 = arith.constant 9.99999974E-6 : f32
    %19 = vector.broadcast %cst_8 : f32 to vector<16x8xf32>
    %20 = arith.maximumf %18, %19 : vector<16x8xf32>
    %21 = math.log %20 : vector<16x8xf32>
    %c0_9 = arith.constant 0 : index
    %c0_10 = arith.constant 0 : index
    %c0_11 = arith.constant 0 : index
    %22 = vector.load %arg5[%c0_9, %c0_10, %c0_11] : memref<1x16x8xf32, #tpu.memory_space<vmem>>, vector<1x16x8xf32>
    %23 = vector.shape_cast %22 : vector<1x16x8xf32> to vector<16x8xf32>
    %24 = vector.shape_cast %21 : vector<16x8xf32> to vector<1x16x8xf32>
    tpu.vector_store %arg5[%c0_9, %c0_10, %c0_11], %24 {strides = array<i32>} : memref<1x16x8xf32, #tpu.memory_space<vmem>>, vector<1x16x8xf32>,
    return
  }
  func.func @transform_0(%arg0: i32, %arg1: i32) -> (i32, i32, i32, i32) {
    %c0_i32 = arith.constant 0 : i32
    %c0_i32_0 = arith.constant 0 : i32
    %c0_i32_1 = arith.constant 0 : i32
    return %arg0, %arg1, %c0_i32, %c0_i32_0 : i32, i32, i32, i32
  }
  func.func @transform_1(%arg0: i32, %arg1: i32) -> (i32, i32) {
    %c0_i32 = arith.constant 0 : i32
    %c0_i32_0 = arith.constant 0 : i32
    %c0_i32_1 = arith.constant 0 : i32
    return %c0_i32, %c0_i32_0 : i32, i32
  }
  func.func @transform_2(%arg0: i32, %arg1: i32) -> (i32, i32) {
    %c0_i32 = arith.constant 0 : i32
    %c0_i32_0 = arith.constant 0 : i32
    %c0_i32_1 = arith.constant 0 : i32
    return %c0_i32, %c0_i32_0 : i32, i32
  }
  func.func @transform_3(%arg0: i32, %arg1: i32) -> (i32, i32, i32) {
    %c0_i32 = arith.constant 0 : i32
    %c0_i32_0 = arith.constant 0 : i32
    return %arg0, %c0_i32, %arg1 : i32, i32, i32
  }
}

</mosaic_0001>

<llo_original>
// kernel: tpu_custom_call.1
$region0: #{tpu_custom_call.1}
  #allocation0 [shape = 'u32[]', space=smem, size = 0x4, offset = 0x4, fixed_abs, tag = 'smem constant byte address 0x4 - core index']
  #allocation1 [shape = 'u32[144,128]{1,0:T(1,128)}', space=vmem, size = 0x12000, scoped, tag = 'internal scratch']
  %s0 = inlined_call_operand.vmem [shape: f32[2,1,11,32], index: 0, kind: input, shape index: {}]
  %s1 = inlined_call_operand.hbm [shape: bf16[128,256], index: 1, kind: input, shape index: {}]
  %s2 = inlined_call_operand.vmem [shape: bf16[16,128], index: 2, kind: input, shape index: {}]
  %s3 = inlined_call_operand.vmem [shape: f32[2,16,8], index: 3, kind: output, shape index: {}]
  %s4 = sld [smem:[#allocation0]]
  $region49: #{tpu_custom_call.1} parent=0
    _
  %s6 = ssub.s32 1, %s4
  %s7 = scalar_select 0, %s6, %s4
  $region1: #{tpu_custom_call.1} parent=0
    #allocation2 [shape = 'u8[65536]{0}', space=vmem, size = 0x10000, scoped, tag = 'input window, operand 1, single buffered']
    #allocation3 [shape = 's32[2]{0}', space=sflag, size = 0x8, scoped, tag = 'scoped memory for tpu_custom_call.1']
    %8 = vsyncpa [#allocation3], 0
    loop: start=0, step=1, limit=4
    $region2: #{tpu_custom_call.1} parent=1 // loop_pre_header
      _
    $region3: #{tpu_custom_call.1} parent=1 // loop_header
      %s10 = sphi 0, %s14
      %p11 = scmp.ge.s32.totalorder %s10, 4
      %s17 = sphi 0, %s29
      %s18 = sphi 0, %s25
      %s19 = sphi 0, %s17
      %s20 = sphi 0, %s18
      %s21 = sphi 0, %s19
      %s22 = sphi 0, %s20
      %s34 = sphi 0, %s36
      %s37 = sphi 0, %s34
      %s38 = sphi 0, %s37
      %s54 = sphi 0, %s38
      %s58 = sphi 0, %s58
      %s60 = sphi 0, %s58
      %s61 = sphi 0, %s60
      %s75 = sphi 0, %s61
      %s79 = sphi 0, %s79
      %s81 = sphi 0, %s79
      %s82 = sphi 0, %s81
      %s96 = sphi 0, %s82
      %s104 = sphi 0, %s106
      %s107 = sphi 0, %s104
      %s108 = sphi 0, %s107
      %s124 = sphi 0, %s108
    $region4: #{tpu_custom_call.1} parent=1 // loop_header_branch
      %13 = sbr.rel (%p11) target = $region8
    $region5: #{tpu_custom_call.1} parent=1 // loop_body
      %s15 = ssub.s32 %s10, 1
      %s16 = ssub.s32 %s10, 2
      %s23 = sadd.s32 1, %s18
      %p24 = scmp.ge.s32.totalorder %s23, 1
      %s25 = scalar_select %p24, 0, %s23
      %s26 = sadd.s32 1, %s17
      %s27 = scalar_select %p24, %s26, %s17
      %p28 = scmp.ge.s32.totalorder %s27, 2
      %s29 = scalar_select %p28, 0, %s27
      %s30 = ssub.s32 %s17, %s29
      %s31 = ssub.s32 %s18, %s25
      %s32 = sor.u32 %s30, %s31
      %p33 = scmp.eq.s32.totalorder %s32, 0
      %s35 = sadd.s32 %s34, 1
      %s36 = scalar_select %p33, %s34, %s35
      %p39 = pneg %p33
      %p40 = scmp.eq.s32.totalorder %s10, 1
      %p41 = por %p39, %p40
      %p42 = scmp.ne.s32.totalorder %s34, %s37
      %p43 = scmp.eq.s32.totalorder %s10, 0
      %p44 = por %p42, %p43
      %p45 = scmp.ne.s32.totalorder %s34, %s37
      %p46 = scmp.eq.s32.totalorder %s15, 1
      %p47 = por %p45, %p46
      %p48 = scmp.ne.s32.totalorder %s37, %s38
      %p49 = scmp.eq.s32.totalorder %s15, 0
      %p50 = por %p48, %p49
      %p51 = scmp.ne.s32.totalorder %s37, %s38
      %p52 = scmp.eq.s32.totalorder %s16, 1
      %p53 = por %p51, %p52
      %p55 = scmp.ne.s32.totalorder %s38, %s54
      %p56 = scmp.eq.s32.totalorder %s16, 0
      %p57 = por %p55, %p56
      %s59 = sadd.s32 %s58, 1
      %p62 = scmp.eq.s32.totalorder %s10, 1
      %p63 = scmp.ne.s32.totalorder %s58, %s60
      %p64 = scmp.eq.s32.totalorder %s10, 0
      %p65 = por %p63, %p64
      %p66 = scmp.ne.s32.totalorder %s58, %s60
      %p67 = scmp.eq.s32.totalorder %s15, 1
      %p68 = por %p66, %p67
      %p69 = scmp.ne.s32.totalorder %s60, %s61
      %p70 = scmp.eq.s32.totalorder %s15, 0
      %p71 = por %p69, %p70
      %p72 = scmp.ne.s32.totalorder %s60, %s61
      %p73 = scmp.eq.s32.totalorder %s16, 1
      %p74 = por %p72, %p73
      %p76 = scmp.ne.s32.totalorder %s61, %s75
      %p77 = scmp.eq.s32.totalorder %s16, 0
      %p78 = por %p76, %p77
      %s80 = sadd.s32 %s79, 1
      %p83 = scmp.eq.s32.totalorder %s10, 1
      %p84 = scmp.ne.s32.totalorder %s79, %s81
      %p85 = scmp.eq.s32.totalorder %s10, 0
      %p86 = por %p84, %p85
      %p87 = scmp.ne.s32.totalorder %s79, %s81
      %p88 = scmp.eq.s32.totalorder %s15, 1
      %p89 = por %p87, %p88
      %p90 = scmp.ne.s32.totalorder %s81, %s82
      %p91 = scmp.eq.s32.totalorder %s15, 0
      %p92 = por %p90, %p91
      %p93 = scmp.ne.s32.totalorder %s81, %s82
      %p94 = scmp.eq.s32.totalorder %s16, 1
      %p95 = por %p93, %p94
      %p97 = scmp.ne.s32.totalorder %s82, %s96
      %p98 = scmp.eq.s32.totalorder %s16, 0
      %p99 = por %p97, %p98
      %s100 = ssub.s32 %s17, %s29
      %s101 = ssub.s32 %s18, %s25
      %s102 = sor.u32 %s100, %s101
      %p103 = scmp.eq.s32.totalorder %s102, 0
      %s105 = sadd.s32 %s104, 1
      %s106 = scalar_select %p103, %s104, %s105
      %p109 = pneg %p103
      %p110 = scmp.eq.s32.totalorder %s10, 1
      %p111 = por %p109, %p110
      %p112 = scmp.ne.s32.totalorder %s104, %s107
      %p113 = scmp.eq.s32.totalorder %s10, 0
      %p114 = por %p112, %p113
      %p115 = scmp.ne.s32.totalorder %s104, %s107
      %p116 = scmp.eq.s32.totalorder %s15, 1
      %p117 = por %p115, %p116
      %p118 = scmp.ne.s32.totalorder %s107, %s108
      %p119 = scmp.eq.s32.totalorder %s15, 0
      %p120 = por %p118, %p119
      %p121 = scmp.ne.s32.totalorder %s107, %s108
      %p122 = scmp.eq.s32.totalorder %s16, 1
      %p123 = por %p121, %p122
      %p125 = scmp.ne.s32.totalorder %s108, %s124
      %p126 = scmp.eq.s32.totalorder %s16, 0
      %p127 = por %p125, %p126
      %p128 = scmp.le.s32.totalorder 1, %s10
      %p129 = scmp.lt.s32.totalorder %s10, 3
      %p130 = pnand %p128, %p129
      %p131 = pneg %p130
      // Predicated region
      $region9: #{tpu_custom_call.1} parent=5 // pred_check
        _
      $region10: #{tpu_custom_call.1} parent=5 // pred_check_branch
        %133 = sbr.rel (%p130) target = $region12
      $region11: #{tpu_custom_call.1} parent=5 // pred_region
        %s134 = ssub.s32 %s10, 1
        // Predicated region
        $region13: #{tpu_custom_call.1} parent=11 // pred_check
          %p135 = pneg %p71
        $region14: #{tpu_custom_call.1} parent=11 // pred_check_branch
          %137 = sbr.rel (%p135) target = $region16
        $region15: #{tpu_custom_call.1} parent=11 // pred_region
          %s139 = ssub.s32 2048, 2048
          %140 = vsyncadd [#allocation3], %s139
          %s141 = sshll.u32 [#allocation2], 4
          %s142 = int_to_ptr.vmem [resolvable:$true] %s141
          %147 = dma.hbm_to_vmem [thread:$0]  %s1, 2048, %s142, [#allocation3], 128, 128, 8
        $region16: #{tpu_custom_call.1} parent=11 // pred_fallthru
          _
        // Predicated region
        $region17: #{tpu_custom_call.1} parent=11 // pred_check
          %p148 = pneg %p92
        $region18: #{tpu_custom_call.1} parent=11 // pred_check_branch
          %150 = sbr.rel (%p148) target = $region20
        $region19: #{tpu_custom_call.1} parent=11 // pred_region
          _
        $region20: #{tpu_custom_call.1} parent=11 // pred_fallthru
          _
      $region12: #{tpu_custom_call.1} parent=5 // pred_fallthru
        _
      %p151 = scmp.lt.s32.totalorder %s10, 2
      // Predicated region
      $region21: #{tpu_custom_call.1} parent=5 // pred_check
        %p152 = pneg %p151
      $region22: #{tpu_custom_call.1} parent=5 // pred_check_branch
        %154 = sbr.rel (%p152) target = $region24
      $region23: #{tpu_custom_call.1} parent=5 // pred_region
        // Predicated region
        $region25: #{tpu_custom_call.1} parent=23 // pred_check
          %p155 = pneg %p44
        $region26: #{tpu_custom_call.1} parent=23 // pred_check_branch
          %157 = sbr.rel (%p155) target = $region28
        $region27: #{tpu_custom_call.1} parent=23 // pred_region
          %p158 = scmp.lt.s32.totalorder %s17, 1
          %s159 = scalar_select %p158, %s17, 1
          %p160 = scmp.lt.s32.totalorder %s18, 0
          %s161 = scalar_select %p160, %s18, 0
          %s162 = smul.addr %s161, 2
          %s163 = smul.addr %s159, 2
          %s164 = sadd.s32 %s162, %s163
          %s165 = smul.addr %s164, 8
          %s166 = scalar_lea.vmem %s0, %s165
        $region28: #{tpu_custom_call.1} parent=23 // pred_fallthru
          _
      $region24: #{tpu_custom_call.1} parent=5 // pred_fallthru
        _
      %p167 = scmp.le.s32.totalorder 1, %s10
      %p168 = scmp.lt.s32.totalorder %s10, 3
      %p169 = pnand %p167, %p168
      %p170 = pneg %p169
      // Predicated region
      $region29: #{tpu_custom_call.1} parent=5 // pred_check
        _
      $region30: #{tpu_custom_call.1} parent=5 // pred_check_branch
        %172 = sbr.rel (%p169) target = $region32
      $region31: #{tpu_custom_call.1} parent=5 // pred_region
        %s173 = ssub.s32 %s10, 1
        // Predicated region
        $region33: #{tpu_custom_call.1} parent=31 // pred_check
          %p174 = pneg %p71
        $region34: #{tpu_custom_call.1} parent=31 // pred_check_branch
          %176 = sbr.rel (%p174) target = $region36
        $region35: #{tpu_custom_call.1} parent=31 // pred_region
          %177 = dma.done [#allocation3], 2048
        $region36: #{tpu_custom_call.1} parent=31 // pred_fallthru
          _
        %p178 = scmp.lt.s32.totalorder %s19, 1
        %s179 = scalar_select %p178, %s19, 1
        %p180 = scmp.lt.s32.totalorder %s20, 0
        %s181 = scalar_select %p180, %s20, 0
        %s182 = smul.addr %s181, 2
        %s183 = smul.addr %s179, 2
        %s184 = sadd.s32 %s182, %s183
        %s185 = smul.addr %s184, 8
        %s186 = scalar_lea.vmem %s0, %s185
        %p187 = pneg %p50
        %p188 = pneg %p47
        %p189 = pneg %p71
        %p190 = pneg %p68
        %p191 = pneg %p92
        %p192 = pneg %p89
        %p193 = pneg %p120
        %p194 = pneg %p117
        %p195 = scmp.lt.s32.totalorder %s19, 1
        %s196 = scalar_select %p195, %s19, 1
        %p197 = scmp.lt.s32.totalorder %s20, 0
        %s198 = scalar_select %p197, %s20, 0
        %s199 = smul.addr %s196, 2
        %s200 = sadd.s32 %s198, %s199
        %s201 = smul.addr %s200, 8
        %s202 = scalar_lea.vmem %s3, %s201
        %p203 = scmp.lt.s32.totalorder %s19, 1
        %s204 = scalar_select %p203, %s19, 1
        %p205 = scmp.lt.s32.totalorder %s20, 0
        %s206 = scalar_select %p205, %s20, 0
        %s207 = smul.addr %s206, 2
        %s208 = smul.addr %s204, 2
        %s209 = sadd.s32 %s207, %s208
        %s210 = smul.addr %s209, 8
        %s211 = scalar_lea.vmem %s0, %s210
        %p212 = scmp.lt.s32.totalorder %s19, 1
        %s213 = scalar_select %p212, %s19, 1
        %p214 = scmp.lt.s32.totalorder %s20, 0
        %s215 = scalar_select %p214, %s20, 0
        %s216 = smul.addr %s213, 2
        %s217 = sadd.s32 %s215, %s216
        %s218 = smul.addr %s217, 8
        %s219 = scalar_lea.vmem %s3, %s218
        %v221 = vld [vmem:[%s211] sm:$0xff]
        %v222 = vld [vmem:[%s211 + $0x8] sm:$0x7]
        %v223 = vpack.c.bf16 %v222, %v221
        %v225 = vshrl.u32 %v223, 16
        %v227 = vshll.u32 %v223, 16
        %v229 = vrot.slane %v227, 1
        %v230 = vor.u32 %v225, %v229
        %231 = vrot.lane.b32.xlu0 %v230, 32
        %v232 = vpop.permute.xlu0 %231
        %v234 = vrot.slane %v223, 1
        %235 = vrot.lane.b32.xlu0 %v234, 64
        %v236 = vpop.permute.xlu0 %235
        %v237 = vrot.slane %v225, 1
        %v238 = vrot.slane %v227, 2
        %v239 = vor.u32 %v237, %v238
        %240 = vrot.lane.b32.xlu0 %v239, 96
        %v241 = vpop.permute.xlu0 %240
        %vm242 = vcmask 261120
        %v244 = vsel %vm242, %v223, %v232
        %vm245 = vcmask 523264
        %v247 = vsel %vm245, %v244, %v236
        %vm248 = vcmask 785408
        %v250 = vsel %vm248, %v247, %v241
        %v252 = vld [vmem:[#allocation2] sm:$0xff]
        %v253 = vld [vmem:[#allocation2 + $0x8] sm:$0xff]
        %v254 = vld [vmem:[#allocation2 + $0x10] sm:$0xff]
        %v255 = vld [vmem:[#allocation2 + $0x18] sm:$0xff]
        %v256 = vld [vmem:[#allocation2 + $0x20] sm:$0xff]
        %v257 = vld [vmem:[#allocation2 + $0x28] sm:$0xff]
        %v258 = vld [vmem:[#allocation2 + $0x30] sm:$0xff]
        %v259 = vld [vmem:[#allocation2 + $0x38] sm:$0xff]
        %v260 = vld [vmem:[#allocation2 + $0x40] sm:$0xff]
        %v261 = vld [vmem:[#allocation2 + $0x48] sm:$0xff]
        %v262 = vld [vmem:[#allocation2 + $0x50] sm:$0xff]
        %v263 = vld [vmem:[#allocation2 + $0x58] sm:$0xff]
        %v264 = vld [vmem:[#allocation2 + $0x60] sm:$0xff]
        %v265 = vld [vmem:[#allocation2 + $0x68] sm:$0xff]
        %v266 = vld [vmem:[#allocation2 + $0x70] sm:$0xff]
        %v267 = vld [vmem:[#allocation2 + $0x78] sm:$0xff]
        %v284 = vunpack.c.l.b16 %v252
        %v285 = vunpack.c.h.b16 %v252
        %v286 = vunpack.c.l.b16 %v253
        %v287 = vunpack.c.h.b16 %v253
        %v288 = vunpack.c.l.b16 %v254
        %v289 = vunpack.c.h.b16 %v254
        %v290 = vunpack.c.l.b16 %v255
        %v291 = vunpack.c.h.b16 %v255
        %v292 = vunpack.c.l.b16 %v256
        %v293 = vunpack.c.h.b16 %v256
        %v294 = vunpack.c.l.b16 %v257
        %v295 = vunpack.c.h.b16 %v257
        %v296 = vunpack.c.l.b16 %v258
        %v297 = vunpack.c.h.b16 %v258
        %v298 = vunpack.c.l.b16 %v259
        %v299 = vunpack.c.h.b16 %v259
        %v300 = vunpack.c.l.b16 %v260
        %v301 = vunpack.c.h.b16 %v260
        %v302 = vunpack.c.l.b16 %v261
        %v303 = vunpack.c.h.b16 %v261
        %v304 = vunpack.c.l.b16 %v262
        %v305 = vunpack.c.h.b16 %v262
        %v306 = vunpack.c.l.b16 %v263
        %v307 = vunpack.c.h.b16 %v263
        %v308 = vunpack.c.l.b16 %v264
        %v309 = vunpack.c.h.b16 %v264
        %v310 = vunpack.c.l.b16 %v265
        %v311 = vunpack.c.h.b16 %v265
        %v312 = vunpack.c.l.b16 %v266
        %v313 = vunpack.c.h.b16 %v266
        %v314 = vunpack.c.l.b16 %v267
        %v315 = vunpack.c.h.b16 %v267
        %v316 = vpack.c.b16 %v286, %v284
        %v317 = vpack.c.b16 %v287, %v285
        %v318 = vpack.c.b16 %v290, %v288
        %v319 = vpack.c.b16 %v291, %v289
        %v320 = vpack.c.b16 %v294, %v292
        %v321 = vpack.c.b16 %v295, %v293
        %v322 = vpack.c.b16 %v298, %v296
        %v323 = vpack.c.b16 %v299, %v297
        %v324 = vpack.c.b16 %v302, %v300
        %v325 = vpack.c.b16 %v303, %v301
        %v326 = vpack.c.b16 %v306, %v304
        %v327 = vpack.c.b16 %v307, %v305
        %v328 = vpack.c.b16 %v310, %v308
        %v329 = vpack.c.b16 %v311, %v309
        %v330 = vpack.c.b16 %v314, %v312
        %v331 = vpack.c.b16 %v315, %v313
        %348 = vmatprep.subr.bf16.mxu0 %v331
        %349 = vmatpush1.bf16.msra.mxu0 %v330
        %350 = vmatprep.subr.bf16.mxu0 %v329
        %351 = vmatpush1.bf16.msra.mxu0 %v328
        %352 = vmatprep.subr.bf16.mxu0 %v327
        %353 = vmatpush1.bf16.msra.mxu0 %v326
        %354 = vmatprep.subr.bf16.mxu0 %v325
        %355 = vmatpush1.bf16.msra.mxu0 %v324
        %356 = vmatprep.subr.bf16.mxu0 %v323
        %357 = vmatpush1.bf16.msra.mxu0 %v322
        %358 = vmatprep.subr.bf16.mxu0 %v321
        %359 = vmatpush1.bf16.msra.mxu0 %v320
        %360 = vmatprep.subr.bf16.mxu0 %v319
        %361 = vmatpush1.bf16.msra.mxu0 %v318
        %362 = vmatprep.subr.bf16.mxu0 %v317
        %363 = vmatpush1.bf16.msra.mxu0 %v316
        %364 = vmatprep.subr.bf16.mxu0 0
        %365 = vmatpush2.bf16.msra.mxu0 0
        %366 = vmatprep.subr.bf16.mxu0 0
        %367 = vmatpush2.bf16.msra.mxu0 0
        %368 = vmatprep.subr.bf16.mxu0 0
        %369 = vmatpush2.bf16.msra.mxu0 0
        %370 = vmatprep.subr.bf16.mxu0 0
        %371 = vmatpush2.bf16.msra.mxu0 0
        %372 = vmatprep.subr.bf16.mxu0 0
        %373 = vmatpush2.bf16.msra.mxu0 0
        %374 = vmatprep.subr.bf16.mxu0 0
        %375 = vmatpush2.bf16.msra.mxu0 0
        %376 = vmatprep.subr.bf16.mxu0 0
        %377 = vmatpush2.bf16.msra.mxu0 0
        %378 = vmatprep.subr.bf16.mxu0 0
        %379 = vmatpush2.bf16.msra.mxu0 0
        %380 = vmatprep.mubr.bf16.mxu0 0
        %381 = vmatmul.mubr.bf16.gmra.mxu0 %v250
        %v382 = vpop.f32.mrf.mxu0
        %v383 = vadd.f32 0.0, %v382
        %v384 = vpop.f32.mrf.mxu0
        %v385 = vadd.f32 0.0, %v384
        %v386 = vpop.f32.mrf.mxu0
        %v387 = vpop.f32.mrf.mxu0
        %388 = vdwg.mxu0
        %v389 = vmul.f32 %v383, %v383
        %v390 = vmul.f32 %v385, %v385
        %v391 = vadd.f32 %v389, %v390
        %v392 = vrsqrt.pop %v391
        %v393 = vmul.f32 %v391, %v392
        %vm394 = vcmp.eq.f32.partialorder %v391, inf
        %v395 = vsel %vm394, %v391, %v393
        %vm396 = vcmp.eq.f32.partialorder %v391, 0.0
        %v397 = vand.u32 %v391, 2147483648
        %v398 = vsel %vm396, %v397, %v395
        %v399 = vld [vmem:[%s2] sm:$0xf]
        %v400 = vld [vmem:[%s2 + $0x4] sm:$0xf]
        %v401 = vpack.c.bf16 %v398, %v398
        %v404 = vunpack.c.l.b16 %v399
        %v405 = vunpack.c.l.b16 %v400
        %v406 = vpack.c.b16 %v405, %v404
        %408 = vmatprep.subr.bf16.mxu0 0
        %409 = vmatpush1.bf16.xpose.msra.mxu0 0
        %410 = vmatprep.subr.bf16.mxu0 0
        %411 = vmatpush1.bf16.xpose.msra.mxu0 0
        %412 = vmatprep.subr.bf16.mxu0 0
        %413 = vmatpush1.bf16.xpose.msra.mxu0 0
        %414 = vmatprep.subr.bf16.mxu0 0
        %415 = vmatpush1.bf16.xpose.msra.mxu0 0
        %416 = vmatprep.subr.bf16.mxu0 0
        %417 = vmatpush1.bf16.xpose.msra.mxu0 0
        %418 = vmatprep.subr.bf16.mxu0 0
        %419 = vmatpush1.bf16.xpose.msra.mxu0 0
        %420 = vmatprep.subr.bf16.mxu0 0
        %421 = vmatpush1.bf16.xpose.msra.mxu0 0
        %422 = vmatprep.subr.bf16.mxu0 0
        %423 = vmatpush1.bf16.xpose.msra.mxu0 %v401
        %424 = vmatprep.subr.bf16.mxu0 0
        %425 = vmatpush2.bf16.xpose.msra.mxu0 0
        %426 = vmatprep.subr.bf16.mxu0 0
        %427 = vmatpush2.bf16.xpose.msra.mxu0 0
        %428 = vmatprep.subr.bf16.mxu0 0
        %429 = vmatpush2.bf16.xpose.msra.mxu0 0
        %430 = vmatprep.subr.bf16.mxu0 0
        %431 = vmatpush2.bf16.xpose.msra.mxu0 0
        %432 = vmatprep.subr.bf16.mxu0 0
        %433 = vmatpush2.bf16.xpose.msra.mxu0 0
        %434 = vmatprep.subr.bf16.mxu0 0
        %435 = vmatpush2.bf16.xpose.msra.mxu0 0
        %436 = vmatprep.subr.bf16.mxu0 0
        %437 = vmatpush2.bf16.xpose.msra.mxu0 0
        %438 = vmatprep.subr.bf16.mxu0 0
        %439 = vmatpush2.bf16.xpose.msra.mxu0 0
        %440 = vmatprep.mubr.bf16.mxu0 0
        %441 = vmatmul.mubr.bf16.gmra.mxu0 %v406
        %v442 = vpop.f32.mrf.mxu0
        %v443 = vadd.f32 0.0, %v442
        %v444 = vpop.f32.mrf.mxu0
        %v445 = vpop.f32.mrf.mxu0
        %v446 = vadd.f32 0.0, %v445
        %v447 = vpop.f32.mrf.mxu0
        %448 = vdwg.mxu0
        %v449 = vmax.f32 %v443, 1e-05
        %v450 = vmax.f32 %v446, 1e-05
        %v451 = vlog2.pop %v449
        %v452 = vmul.f32 %v451, 0.6931472
        %v453 = vlog2.pop %v450
        %v454 = vmul.f32 %v453, 0.6931472
        %vm455 = vcmask 64512
        %456 = vst.msk [vmem:[%s219] sm:$0xff] %vm455, %v452
        %457 = vst.msk [vmem:[%s219 + $0x8] sm:$0xff] %vm455, %v454
        %p458 = scmp.lt.s32.totalorder %s19, 1
        %s459 = scalar_select %p458, %s19, 1
        %p460 = scmp.lt.s32.totalorder %s20, 0
        %s461 = scalar_select %p460, %s20, 0
        %s462 = smul.addr %s459, 2
        %s463 = sadd.s32 %s461, %s462
        %s464 = smul.addr %s463, 8
        %s465 = scalar_lea.vmem %s3, %s464
        // Predicated region
        $region37: #{tpu_custom_call.1} parent=31 // pred_check
          %p466 = pneg %p117
        $region38: #{tpu_custom_call.1} parent=31 // pred_check_branch
          %468 = sbr.rel (%p466) target = $region40
        $region39: #{tpu_custom_call.1} parent=31 // pred_region
          _
        $region40: #{tpu_custom_call.1} parent=31 // pred_fallthru
          _
      $region32: #{tpu_custom_call.1} parent=5 // pred_fallthru
        _
      %p469 = scmp.le.s32.totalorder 2, %s10
      // Predicated region
      $region41: #{tpu_custom_call.1} parent=5 // pred_check
        %p470 = pneg %p469
      $region42: #{tpu_custom_call.1} parent=5 // pred_check_branch
        %472 = sbr.rel (%p470) target = $region44
      $region43: #{tpu_custom_call.1} parent=5 // pred_region
        %s473 = ssub.s32 %s10, 2
        // Predicated region
        $region45: #{tpu_custom_call.1} parent=43 // pred_check
          %p474 = pneg %p123
        $region46: #{tpu_custom_call.1} parent=43 // pred_check_branch
          %476 = sbr.rel (%p474) target = $region48
        $region47: #{tpu_custom_call.1} parent=43 // pred_region
          %p477 = scmp.lt.s32.totalorder %s21, 1
          %s478 = scalar_select %p477, %s21, 1
          %p479 = scmp.lt.s32.totalorder %s22, 0
          %s480 = scalar_select %p479, %s22, 0
          %s481 = smul.addr %s478, 2
          %s482 = sadd.s32 %s480, %s481
          %s483 = smul.addr %s482, 8
          %s484 = scalar_lea.vmem %s3, %s483
        $region48: #{tpu_custom_call.1} parent=43 // pred_fallthru
          _
      $region44: #{tpu_custom_call.1} parent=5 // pred_fallthru
        _
    $region6: #{tpu_custom_call.1} parent=1 // loop_footer
      %s14 = sadd.s32 1, %s10
    $region7: #{tpu_custom_call.1} parent=1 // loop_footer_branch
      %9 = sbr.rel target = $region3
    $region8: #{tpu_custom_call.1} parent=1 // loop_exit
      _
    %485 = vsyncpa [#allocation3], 1
    %s486 = scalar_lea.sflag [#allocation3], 1
    %487 = vsyncpa %s486, 1

</llo_original>
